<compile_context>
chip_gen: v6e
topology: v6e:2x2x1
jax: 0.10.0
libtpu: 0.0.40
codegen_flags: <defaults>
</compile_context>

<pallas_src>
import functools

import numpy as np
import jax
import jax.numpy as jnp
from jax.experimental import pallas as pl
from jax.experimental.pallas import tpu as pltpu


# --------------------------------------------------------------------------
# Pass 1: coarse transposed conv (width-unrolled sub-pixel matmul) + bias
#         + fused BatchNorm partial statistics.
# --------------------------------------------------------------------------
def _convt_coarse_kernel(x_ref, w_ref, b_ref, out_ref, stats_ref, *, Hc, Pc):
    # x_ref:     (1, Hp, Wp*Cin)   bf16  dense input + halo pad, width/chan flattened
    # w_ref:     (Pc, Wp*Cin, L1)  bf16  width-unrolled sub-pixel weight
    # b_ref:     (1, L1)           f32   conv bias tiled over (rho_h, w, rho_w)
    # out_ref:   (1, Hc, L1)       bf16  lane-dense coarse output (pre-BN, with bias)
    # stats_ref: (1, 2, L1)        f32   [sum, sum-of-squares] of the bias-free values
    raw = jnp.dot(x_ref[0, 0:Hc, :], w_ref[0],
                  preferred_element_type=jnp.float32)            # (Hc, L1) f32
    for ph in range(1, Pc):
        raw = raw + jnp.dot(x_ref[0, ph:ph + Hc, :], w_ref[ph],
                            preferred_element_type=jnp.float32)

    out_ref[...] = (raw + b_ref[...]).astype(out_ref.dtype).reshape(out_ref.shape)

    # Fused BN partial stats, computed around the bias shift (bias-free values)
    # to reduce catastrophic cancellation in the E[x^2]-E[x]^2 fold.
    stats_ref[0, 0:1, :] = jnp.sum(raw, axis=0, keepdims=True)
    stats_ref[0, 1:2, :] = jnp.sum(raw * raw, axis=0, keepdims=True)


# --------------------------------------------------------------------------
# Pass 2: BN affine (precomputed per-channel scale/shift, tiled per lane)
#         + LeakyReLU on the lane-dense, already pixel-shuffled view.
# --------------------------------------------------------------------------
def _bn_leaky_kernel(y_ref, scale_ref, shift_ref, o_ref, *, neg_slope):
    z = y_ref[...].astype(jnp.float32) * scale_ref[...] + shift_ref[...]
    o_ref[...] = jnp.where(z >= 0.0, z, neg_slope * z)


def conv2d_transpose_block(x_nchw, weight, bias, gamma, beta, *,
                           stride, padding, output_padding=0,
                           negative_slope=0.2, eps=1e-5):
    """PyTorch-equivalent forward of Conv2dTranspose(act='leaky').

    x_nchw: (N, Cin, H, W), weight: (Cin, Cout, K, K) — PyTorch conventions.
    Returns (N, Cout, Hout, Wout), float32.
    """
    x_nchw = jnp.asarray(x_nchw, jnp.float32)
    weight = jnp.asarray(weight, jnp.float32)
    bias = jnp.asarray(bias, jnp.float32)
    gamma = jnp.asarray(gamma, jnp.float32)
    beta = jnp.asarray(beta, jnp.float32)
    N, Cin, H, W = x_nchw.shape
    Cin_w, Cout, K, K2 = weight.shape
    assert Cin_w == Cin and K == K2
    s, p, op = int(stride), int(padding), int(output_padding)

    Hout = (H - 1) * s - 2 * p + K + op
    Wout = (W - 1) * s - 2 * p + K + op
    assert Hout > 0 and Wout > 0
    # TODO(synk): strides that do not divide Hout/Wout need a cropped coarse grid
    # and masked BN statistics; not required for this module's configs.
    assert Hout % s == 0 and Wout % s == 0, "sub-pixel path needs stride | Hout, Wout"

    Kc = -(-K // s)                       # ceil(K / stride)
    d_min = p // s
    d_max = (s - 1 + p) // s
    Pc = d_max - d_min + Kc               # coarse patch extent per spatial axis
    Lpad = Kc - 1 - d_min
    assert Lpad >= 0, "padding larger than stride*ceil(K/stride)-1 not supported"
    Hc, Wc = Hout // s, Wout // s
    Rpad_h = max(0, Hc + d_max - H)
    Rpad_w = max(0, Wc + d_max - W)
    Hp, Wp = Lpad + H + Rpad_h, Lpad + W + Rpad_w
    L1 = s * Wc * s * Cout                # lane width of the coarse output rows
    L2 = Wout * Cout                      # lane width of pass 2 / NHWC output rows

    # ---- glue (layout only): NCHW->NHWC, halo pad, row-flatten, bf16 cast ----
    # TODO(synk): for large H/W/Cin fold transpose+pad+cast into the kernel path
    # (accept NHWC input, mask edge tiles) to remove these extra HBM passes.
    x = jnp.transpose(x_nchw, (0, 2, 3, 1))
    xp = jnp.pad(x, ((0, 0), (Lpad, Rpad_h), (Lpad, Rpad_w), (0, 0)))
    xp = xp.reshape(N, Hp, Wp * Cin).astype(jnp.bfloat16)

    # ---- sub-pixel weight, unrolled (block-Toeplitz) along the width axis ----
    # A[ph, rho, kh] = 1 iff kernel tap kh contributes to output residue rho
    # through padded-patch row ph (transposed-conv index identity).
    A = np.zeros((Pc, s, K), np.float32)
    for rho in range(s):
        for kh in range(K):
            t = rho + p - kh
            if t % s == 0:
                ph = t // s + Lpad
                if 0 <= ph < Pc:
                    A[ph, rho, kh] = 1.0
    # T[w, pwp, pw] = 1 iff absolute padded column pwp == w + pw (Toeplitz unroll).
    T = np.zeros((Wc, Wp, Pc), np.float32)
    for w in range(Wc):
        for q in range(Pc):
            T[w, w + q, q] = 1.0
    w6 = jnp.einsum('prk,qsl,iokl->pqirso', A, A, weight)      # (Pc,Pc,Cin,s,s,Cout)
    wB = jnp.einsum('wQq,pqirso->pQirwso', T, w6)              # (Pc,Wp,Cin,s,Wc,s,Cout)
    wB = wB.reshape(Pc, Wp * Cin, L1).astype(jnp.bfloat16)
    # TODO(synk): the width-unrolled weight scales as O(W^2 * Cin * Cout * K/s * s);
    # for large W, tile the width axis instead of unrolling it fully.
    b_row = jnp.tile(bias, s * Wc * s).reshape(1, L1)

    # ---- pass 1: coarse transposed conv + bias + BN partial stats ------------
    blk1 = 2 * (Hp * Wp * Cin * 2 + Pc * Wp * Cin * L1 * 2 + L1 * 4
                + Hc * L1 * 2 + 2 * L1 * 4)          # double-buffered block bytes
    vmem1 = min(64 << 20, max(8 << 20, 4 * blk1))
    kernel1 = functools.partial(_convt_coarse_kernel, Hc=Hc, Pc=Pc)
    coarse, stats = pl.pallas_call(
        kernel1,
        out_shape=(jax.ShapeDtypeStruct((N, Hc, L1), jnp.bfloat16),
                   jax.ShapeDtypeStruct((N, 2, L1), jnp.float32)),
        grid=(N,),
        in_specs=[pl.BlockSpec((1, Hp, Wp * Cin), lambda n: (n, 0, 0)),
                  pl.BlockSpec((Pc, Wp * Cin, L1), lambda n: (0, 0, 0)),
                  pl.BlockSpec((1, L1), lambda n: (0, 0))],
        out_specs=(pl.BlockSpec((1, Hc, L1), lambda n: (n, 0, 0)),
                   pl.BlockSpec((1, 2, L1), lambda n: (n, 0, 0))),
        compiler_params=pltpu.CompilerParams(
            dimension_semantics=("parallel",),        # megacore-shardable on v7x
            vmem_limit_bytes=vmem1),
    )(xp, wB, b_row)

    # ---- fold shifted partial stats into per-channel BN scale/shift (O(Cout)) -
    cnt = float(N * Hout * Wout)
    st = stats.reshape(N, 2, s, Wc, s, Cout)
    ssum = st[:, 0].sum(axis=(0, 1, 2, 3))            # sum of (conv - bias) per channel
    ssq = st[:, 1].sum(axis=(0, 1, 2, 3))
    mean_shift = ssum / cnt
    mean = bias + mean_shift
    var = jnp.maximum(ssq / cnt - mean_shift * mean_shift, 0.0)   # biased variance
    scale = gamma * jax.lax.rsqrt(var + eps)
    shift = beta - mean * scale

    # ---- pass 2: BN affine + LeakyReLU on the pixel-shuffled lane-dense view --
    # The coarse lane order is (rho_h, w, rho_w, c), so a contiguous row-major
    # reshape already yields the depth-to-space (NHWC) output rows — free.
    R = N * Hout
    y2d = coarse.reshape(R, L2)
    scale_row = jnp.tile(scale, Wout).reshape(1, L2)
    shift_row = jnp.tile(shift, Wout).reshape(1, L2)
    Tr = R
    for cand in (512, 256, 128, 64, 32, 16, 8):
        if R % cand == 0 and R // cand >= 2:          # >= 2 grid steps for v7x megacore
            Tr = cand
            break
    blk2 = 2 * (Tr * L2 * 2 + 2 * L2 * 4 + Tr * L2 * 4)
    vmem2 = min(64 << 20, max(8 << 20, 4 * blk2))
    kernel2 = functools.partial(_bn_leaky_kernel, neg_slope=float(negative_slope))
    out2d = pl.pallas_call(
        kernel2,
        out_shape=jax.ShapeDtypeStruct((R, L2), jnp.float32),
        grid=(R // Tr,),
        in_specs=[pl.BlockSpec((Tr, L2), lambda i: (i, 0)),
                  pl.BlockSpec((1, L2), lambda i: (0, 0)),
                  pl.BlockSpec((1, L2), lambda i: (0, 0))],
        out_specs=pl.BlockSpec((Tr, L2), lambda i: (i, 0)),
        compiler_params=pltpu.CompilerParams(
            dimension_semantics=("parallel",),
            vmem_limit_bytes=vmem2),
    )(y2d, scale_row, shift_row)

    # ---- glue: free reshape to NHWC, single transpose to the NCHW module format
    out = out2d.reshape(N, Hout, Wout, Cout)
    return jnp.transpose(out, (0, 3, 1, 2))


def _reference_numpy(x_nchw, weight, bias, gamma, beta, stride, padding, output_padding):
    """Independent numpy reference: direct scatter definition of ConvTranspose2d."""
    x = np.asarray(x_nchw, np.float64)
    w = np.asarray(weight, np.float64)
    N, Cin, H, W = x.shape
    _, Cout, K, _ = w.shape
    Hout = (H - 1) * stride - 2 * padding + K + output_padding
    Wout = (W - 1) * stride - 2 * padding + K + output_padding
    full = np.zeros((N, (H - 1) * stride + K + output_padding,
                     (W - 1) * stride + K + output_padding, Cout), np.float64)
    for ih in range(H):
        for iw in range(W):
            contrib = np.einsum('nc,cokl->nklo', x[:, :, ih, iw], w)
            full[:, ih * stride:ih * stride + K, iw * stride:iw * stride + K, :] += contrib
    out = full[:, padding:padding + Hout, padding:padding + Wout, :]
    out = out + np.asarray(bias, np.float64)[None, None, None, :]
    mean = out.mean(axis=(0, 1, 2), keepdims=True)
    var = ((out - mean) ** 2).mean(axis=(0, 1, 2), keepdims=True)
    out = (out - mean) / np.sqrt(var + 1e-5) * np.asarray(gamma, np.float64) \
        + np.asarray(beta, np.float64)
    out = np.where(out >= 0, out, 0.2 * out)
    return np.transpose(out, (0, 3, 1, 2))


if __name__ == "__main__":
    # Module config: Conv2dTranspose(cin=4, cout=8, kernel_size=4, stride=2, padding=1)
    N, Cin, H, W = 2, 4, 16, 16
    Cout, K, stride, padding, output_padding = 8, 4, 2, 1, 0

    key = jax.random.PRNGKey(0)
    kx, kw, kb, kg, kbeta = jax.random.split(key, 5)
    x = jax.random.normal(kx, (N, Cin, H, W), jnp.float32)
    weight = 0.1 * jax.random.normal(kw, (Cin, Cout, K, K), jnp.float32)
    bias = 0.1 * jax.random.normal(kb, (Cout,), jnp.float32)
    gamma = 1.0 + 0.1 * jax.random.normal(kg, (Cout,), jnp.float32)
    beta = 0.1 * jax.random.normal(kbeta, (Cout,), jnp.float32)

    out = conv2d_transpose_block(x, weight, bias, gamma, beta,
                                 stride=stride, padding=padding,
                                 output_padding=output_padding)
    out = jax.block_until_ready(out)

    ref = _reference_numpy(x, weight, bias, gamma, beta,
                           stride, padding, output_padding)
    # bf16 MXU inputs / bf16 coarse intermediate (f32 accumulation and stats)
    # vs a float64 reference -> loose tolerance.
    np.testing.assert_allclose(np.asarray(out), ref, rtol=5e-2, atol=5e-2)

    print("KERNEL_OK")
</pallas_src>

<mosaic_0001>
module attributes {stable_mosaic.version = 11 : i64} {
  func.func @_convt_coarse_kernel(%arg0: i32, %arg1: memref<1x18x72xbf16, #tpu.memory_space<vmem>>, %arg2: memref<3x72x512xbf16, #tpu.memory_space<vmem>>, %arg3: memref<1x512xf32, #tpu.memory_space<vmem>>, %arg4: memref<1x16x512xbf16, #tpu.memory_space<vmem>>, %arg5: memref<1x2x512xf32, #tpu.memory_space<vmem>>) attributes {dimension_semantics = [#tpu.dimension_semantics<parallel>], iteration_bounds = array<i64: 2>, scalar_prefetch = 0 : i64, scratch_operands = 0 : i64, tpu.core_type = #tpu.core_type<tc>, window_params = [{transform_indices = @transform_0, window_bounds = array<i64: 1, 18, 72>}, {pipeline_mode = #tpu.pipeline_mode<synchronous>, transform_indices = @transform_1, window_bounds = array<i64: 3, 72, 512>}, {pipeline_mode = #tpu.pipeline_mode<synchronous>, transform_indices = @transform_2, window_bounds = array<i64: 1, 512>}, {transform_indices = @transform_3, window_bounds = array<i64: 1, 16, 512>}, {transform_indices = @transform_4, window_bounds = array<i64: 1, 2, 512>}]} {
    %c0 = arith.constant 0 : index
    %c0_0 = arith.constant 0 : index
    %c0_1 = arith.constant 0 : index
    %0 = vector.load %arg1[%c0, %c0_0, %c0_1] : memref<1x18x72xbf16, #tpu.memory_space<vmem>>, vector<1x16x72xbf16>
    %1 = vector.shape_cast %0 : vector<1x16x72xbf16> to vector<16x72xbf16>
    %c0_2 = arith.constant 0 : index
    %c0_3 = arith.constant 0 : index
    %c0_4 = arith.constant 0 : index
    %2 = vector.load %arg2[%c0_2, %c0_3, %c0_4] : memref<3x72x512xbf16, #tpu.memory_space<vmem>>, vector<1x72x512xbf16>
    %3 = vector.shape_cast %2 : vector<1x72x512xbf16> to vector<72x512xbf16>
    %cst = arith.constant dense<0.000000e+00> : vector<16x512xf32>
    %4 = tpu.matmul %1, %3, %cst {dimension_numbers = #tpu.dot_dimension_numbers<[1], [0], [0], [1], [0, 0, 1, 1], [], []>} : vector<16x72xbf16>, vector<72x512xbf16>, vector<16x512xf32> -> vector<16x512xf32>
    %c0_5 = arith.constant 0 : index
    %c1 = arith.constant 1 : index
    %c0_6 = arith.constant 0 : index
    %5 = vector.load %arg1[%c0_5, %c1, %c0_6] : memref<1x18x72xbf16, #tpu.memory_space<vmem>>, vector<1x16x72xbf16>
    %6 = vector.shape_cast %5 : vector<1x16x72xbf16> to vector<16x72xbf16>
    %c1_7 = arith.constant 1 : index
    %c0_8 = arith.constant 0 : index
    %c0_9 = arith.constant 0 : index
    %7 = vector.load %arg2[%c1_7, %c0_8, %c0_9] : memref<3x72x512xbf16, #tpu.memory_space<vmem>>, vector<1x72x512xbf16>
    %8 = vector.shape_cast %7 : vector<1x72x512xbf16> to vector<72x512xbf16>
    %cst_10 = arith.constant dense<0.000000e+00> : vector<16x512xf32>
    %9 = tpu.matmul %6, %8, %cst_10 {dimension_numbers = #tpu.dot_dimension_numbers<[1], [0], [0], [1], [0, 0, 1, 1], [], []>} : vector<16x72xbf16>, vector<72x512xbf16>, vector<16x512xf32> -> vector<16x512xf32>
    %10 = arith.addf %4, %9 : vector<16x512xf32>
    %c0_11 = arith.constant 0 : index
    %c2 = arith.constant 2 : index
    %c0_12 = arith.constant 0 : index
    %11 = vector.load %arg1[%c0_11, %c2, %c0_12] : memref<1x18x72xbf16, #tpu.memory_space<vmem>>, vector<1x16x72xbf16>
    %12 = vector.shape_cast %11 : vector<1x16x72xbf16> to vector<16x72xbf16>
    %c2_13 = arith.constant 2 : index
    %c0_14 = arith.constant 0 : index
    %c0_15 = arith.constant 0 : index
    %13 = vector.load %arg2[%c2_13, %c0_14, %c0_15] : memref<3x72x512xbf16, #tpu.memory_space<vmem>>, vector<1x72x512xbf16>
    %14 = vector.shape_cast %13 : vector<1x72x512xbf16> to vector<72x512xbf16>
    %cst_16 = arith.constant dense<0.000000e+00> : vector<16x512xf32>
    %15 = tpu.matmul %12, %14, %cst_16 {dimension_numbers = #tpu.dot_dimension_numbers<[1], [0], [0], [1], [0, 0, 1, 1], [], []>} : vector<16x72xbf16>, vector<72x512xbf16>, vector<16x512xf32> -> vector<16x512xf32>
    %16 = arith.addf %10, %15 : vector<16x512xf32>
    %c0_17 = arith.constant 0 : index
    %c0_18 = arith.constant 0 : index
    %17 = vector.load %arg3[%c0_17, %c0_18] : memref<1x512xf32, #tpu.memory_space<vmem>>, vector<1x512xf32>
    %18 = vector.broadcast %17 : vector<1x512xf32> to vector<16x512xf32>
    %19 = arith.addf %16, %18 : vector<16x512xf32>
    %20 = arith.truncf %19 : vector<16x512xf32> to vector<16x512xbf16>
    %21 = vector.shape_cast %20 : vector<16x512xbf16> to vector<1x16x512xbf16>
    %c0_19 = arith.constant 0 : index
    %c0_20 = arith.constant 0 : index
    %c0_21 = arith.constant 0 : index
    %22 = vector.load %arg4[%c0_19, %c0_20, %c0_21] : memref<1x16x512xbf16, #tpu.memory_space<vmem>>, vector<1x16x512xbf16>
    tpu.vector_store %arg4[%c0_19, %c0_20, %c0_21], %21 {strides = array<i32>} : memref<1x16x512xbf16, #tpu.memory_space<vmem>>, vector<1x16x512xbf16>,
    %cst_22 = arith.constant dense<0.000000e+00> : vector<512xf32>
    %23 = vector.multi_reduction <add>, %16, %cst_22 [0] : vector<16x512xf32> to vector<512xf32>
    %24 = vector.shape_cast %23 : vector<512xf32> to vector<1x512xf32>
    %c0_23 = arith.constant 0 : index
    %c0_24 = arith.constant 0 : index
    %c0_25 = arith.constant 0 : index
    %25 = vector.load %arg5[%c0_23, %c0_24, %c0_25] : memref<1x2x512xf32, #tpu.memory_space<vmem>>, vector<1x1x512xf32>
    %26 = vector.shape_cast %25 : vector<1x1x512xf32> to vector<1x512xf32>
    %27 = vector.shape_cast %24 : vector<1x512xf32> to vector<1x1x512xf32>
    tpu.vector_store %arg5[%c0_23, %c0_24, %c0_25], %27 {strides = array<i32>} : memref<1x2x512xf32, #tpu.memory_space<vmem>>, vector<1x1x512xf32>,
    %28 = arith.mulf %16, %16 : vector<16x512xf32>
    %cst_26 = arith.constant dense<0.000000e+00> : vector<512xf32>
    %29 = vector.multi_reduction <add>, %28, %cst_26 [0] : vector<16x512xf32> to vector<512xf32>
    %30 = vector.shape_cast %29 : vector<512xf32> to vector<1x512xf32>
    %c0_27 = arith.constant 0 : index
    %c1_28 = arith.constant 1 : index
    %c0_29 = arith.constant 0 : index
    %31 = vector.load %arg5[%c0_27, %c1_28, %c0_29] : memref<1x2x512xf32, #tpu.memory_space<vmem>>, vector<1x1x512xf32>
    %32 = vector.shape_cast %31 : vector<1x1x512xf32> to vector<1x512xf32>
    %33 = vector.shape_cast %30 : vector<1x512xf32> to vector<1x1x512xf32>
    tpu.vector_store %arg5[%c0_27, %c1_28, %c0_29], %33 {strides = array<i32>} : memref<1x2x512xf32, #tpu.memory_space<vmem>>, vector<1x1x512xf32>,
    return
  }
  func.func @transform_0(%arg0: i32) -> (i32, i32, i32) {
    %c0_i32 = arith.constant 0 : i32
    %c0_i32_0 = arith.constant 0 : i32
    %c0_i32_1 = arith.constant 0 : i32
    return %arg0, %c0_i32, %c0_i32_0 : i32, i32, i32
  }
  func.func @transform_1(%arg0: i32) -> (i32, i32, i32) {
    %c0_i32 = arith.constant 0 : i32
    %c0_i32_0 = arith.constant 0 : i32
    %c0_i32_1 = arith.constant 0 : i32
    %c0_i32_2 = arith.constant 0 : i32
    return %c0_i32, %c0_i32_0, %c0_i32_1 : i32, i32, i32
  }
  func.func @transform_2(%arg0: i32) -> (i32, i32) {
    %c0_i32 = arith.constant 0 : i32
    %c0_i32_0 = arith.constant 0 : i32
    %c0_i32_1 = arith.constant 0 : i32
    return %c0_i32, %c0_i32_0 : i32, i32
  }
  func.func @transform_3(%arg0: i32) -> (i32, i32, i32) {
    %c0_i32 = arith.constant 0 : i32
    %c0_i32_0 = arith.constant 0 : i32
    %c0_i32_1 = arith.constant 0 : i32
    return %arg0, %c0_i32, %c0_i32_0 : i32, i32, i32
  }
  func.func @transform_4(%arg0: i32) -> (i32, i32, i32) {
    %c0_i32 = arith.constant 0 : i32
    %c0_i32_0 = arith.constant 0 : i32
    %c0_i32_1 = arith.constant 0 : i32
    return %arg0, %c0_i32, %c0_i32_0 : i32, i32, i32
  }
}

</mosaic_0001>

<llo_original>
// kernel: tpu_custom_call.1
$region0: #{tpu_custom_call.1}
  #allocation0 [shape = 'u32[]', space=smem, size = 0x4, offset = 0x4, fixed_abs, tag = 'smem constant byte address 0x4 - core index']
  #allocation1 [shape = 'u32[144,128]{1,0:T(1,128)}', space=vmem, size = 0x12000, scoped, tag = 'internal scratch']
  %s0 = inlined_call_operand.vmem [shape: bf16[2,18,72], index: 0, kind: input, shape index: {}]
  %s1 = inlined_call_operand.hbm [shape: bf16[3,72,512], index: 1, kind: input, shape index: {}]
  %s2 = inlined_call_operand.vmem [shape: f32[1,512], index: 2, kind: input, shape index: {}]
  %s3 = inlined_call_operand.hbm [shape: bf16[2,16,512], index: 3, kind: output, shape index: {0}]
  %s4 = inlined_call_operand.hbm [shape: f32[2,2,512], index: 4, kind: output, shape index: {1}]
  %5 = xla_tuple %s3, %s4
  %s6 = sld [smem:[#allocation0]]
  $region57: #{tpu_custom_call.1} parent=0
    _
  %s8 = ssub.s32 1, %s6
  %s9 = scalar_select 0, %s8, %s6
  $region1: #{tpu_custom_call.1} parent=0
    #allocation2 [shape = 'u8[221184]{0}', space=vmem, size = 0x36000, scoped, tag = 'input window, operand 1, single buffered']
    #allocation3 [shape = 's32[2]{0}', space=sflag, size = 0x8, scoped, tag = 'scoped memory for tpu_custom_call.1']
    #allocation4 [shape = 's32[2]{0}', space=sflag, size = 0x8, scoped, tag = 'scoped memory for tpu_custom_call.1']
    #allocation5 [shape = 'u8[32768]{0}', space=vmem, size = 0x8000, scoped, tag = 'output window, operand 0']
    #allocation6 [shape = 'u8[8192]{0}', space=vmem, size = 0x2000, scoped, tag = 'output window, operand 1']
    #allocation7 [shape = 's32[2]{0}', space=sflag, size = 0x8, scoped, tag = 'scoped memory for tpu_custom_call.1']
    %10 = vsyncpa [#allocation3], 0
    %11 = vsyncpa [#allocation4], 0
    %s12 = scalar_lea.sflag [#allocation4], 1
    %13 = vsyncpa %s12, 0
    %14 = vsyncpa [#allocation7], 0
    %s15 = scalar_lea.sflag [#allocation7], 1
    %16 = vsyncpa %s15, 0
    loop: start=0, step=1, limit=4
    $region2: #{tpu_custom_call.1} parent=1 // loop_pre_header
      _
    $region3: #{tpu_custom_call.1} parent=1 // loop_header
      %s18 = sphi 0, %s22
      %p19 = scmp.ge.s32.totalorder %s18, 4
      %s28 = sphi 0, %s30
      %s31 = sphi 0, %s28
      %s32 = sphi 0, %s31
      %s48 = sphi 0, %s32
      %s52 = sphi 0, %s52
      %s54 = sphi 0, %s52
      %s55 = sphi 0, %s54
      %s69 = sphi 0, %s55
      %s73 = sphi 0, %s73
      %s75 = sphi 0, %s73
      %s76 = sphi 0, %s75
      %s90 = sphi 0, %s76
      %s96 = sphi 0, %s98
      %s99 = sphi 0, %s96
      %s100 = sphi 0, %s99
      %s116 = sphi 0, %s100
      %s122 = sphi 0, %s124
      %s125 = sphi 0, %s122
      %s126 = sphi 0, %s125
      %s142 = sphi 0, %s126
    $region4: #{tpu_custom_call.1} parent=1 // loop_header_branch
      %21 = sbr.rel (%p19) target = $region8
    $region5: #{tpu_custom_call.1} parent=1 // loop_body
      %s23 = ssub.s32 %s18, 1
      %s24 = ssub.s32 %s18, 2
      %s25 = sadd.s32 %s18, 1
      %s26 = ssub.s32 %s18, %s25
      %p27 = scmp.eq.s32.totalorder %s26, 0
      %s29 = sadd.s32 %s28, 1
      %s30 = scalar_select %p27, %s28, %s29
      %p33 = pneg %p27
      %p34 = scmp.eq.s32.totalorder %s18, 1
      %p35 = por %p33, %p34
      %p36 = scmp.ne.s32.totalorder %s28, %s31
      %p37 = scmp.eq.s32.totalorder %s18, 0
      %p38 = por %p36, %p37
      %p39 = scmp.ne.s32.totalorder %s28, %s31
      %p40 = scmp.eq.s32.totalorder %s23, 1
      %p41 = por %p39, %p40
      %p42 = scmp.ne.s32.totalorder %s31, %s32
      %p43 = scmp.eq.s32.totalorder %s23, 0
      %p44 = por %p42, %p43
      %p45 = scmp.ne.s32.totalorder %s31, %s32
      %p46 = scmp.eq.s32.totalorder %s24, 1
      %p47 = por %p45, %p46
      %p49 = scmp.ne.s32.totalorder %s32, %s48
      %p50 = scmp.eq.s32.totalorder %s24, 0
      %p51 = por %p49, %p50
      %s53 = sadd.s32 %s52, 1
      %p56 = scmp.eq.s32.totalorder %s18, 1
      %p57 = scmp.ne.s32.totalorder %s52, %s54
      %p58 = scmp.eq.s32.totalorder %s18, 0
      %p59 = por %p57, %p58
      %p60 = scmp.ne.s32.totalorder %s52, %s54
      %p61 = scmp.eq.s32.totalorder %s23, 1
      %p62 = por %p60, %p61
      %p63 = scmp.ne.s32.totalorder %s54, %s55
      %p64 = scmp.eq.s32.totalorder %s23, 0
      %p65 = por %p63, %p64
      %p66 = scmp.ne.s32.totalorder %s54, %s55
      %p67 = scmp.eq.s32.totalorder %s24, 1
      %p68 = por %p66, %p67
      %p70 = scmp.ne.s32.totalorder %s55, %s69
      %p71 = scmp.eq.s32.totalorder %s24, 0
      %p72 = por %p70, %p71
      %s74 = sadd.s32 %s73, 1
      %p77 = scmp.eq.s32.totalorder %s18, 1
      %p78 = scmp.ne.s32.totalorder %s73, %s75
      %p79 = scmp.eq.s32.totalorder %s18, 0
      %p80 = por %p78, %p79
      %p81 = scmp.ne.s32.totalorder %s73, %s75
      %p82 = scmp.eq.s32.totalorder %s23, 1
      %p83 = por %p81, %p82
      %p84 = scmp.ne.s32.totalorder %s75, %s76
      %p85 = scmp.eq.s32.totalorder %s23, 0
      %p86 = por %p84, %p85
      %p87 = scmp.ne.s32.totalorder %s75, %s76
      %p88 = scmp.eq.s32.totalorder %s24, 1
      %p89 = por %p87, %p88
      %p91 = scmp.ne.s32.totalorder %s76, %s90
      %p92 = scmp.eq.s32.totalorder %s24, 0
      %p93 = por %p91, %p92
      %s94 = ssub.s32 %s18, %s25
      %p95 = scmp.eq.s32.totalorder %s94, 0
      %s97 = sadd.s32 %s96, 1
      %s98 = scalar_select %p95, %s96, %s97
      %p101 = pneg %p95
      %p102 = scmp.eq.s32.totalorder %s18, 1
      %p103 = por %p101, %p102
      %p104 = scmp.ne.s32.totalorder %s96, %s99
      %p105 = scmp.eq.s32.totalorder %s18, 0
      %p106 = por %p104, %p105
      %p107 = scmp.ne.s32.totalorder %s96, %s99
      %p108 = scmp.eq.s32.totalorder %s23, 1
      %p109 = por %p107, %p108
      %p110 = scmp.ne.s32.totalorder %s99, %s100
      %p111 = scmp.eq.s32.totalorder %s23, 0
      %p112 = por %p110, %p111
      %p113 = scmp.ne.s32.totalorder %s99, %s100
      %p114 = scmp.eq.s32.totalorder %s24, 1
      %p115 = por %p113, %p114
      %p117 = scmp.ne.s32.totalorder %s100, %s116
      %p118 = scmp.eq.s32.totalorder %s24, 0
      %p119 = por %p117, %p118
      %s120 = ssub.s32 %s18, %s25
      %p121 = scmp.eq.s32.totalorder %s120, 0
      %s123 = sadd.s32 %s122, 1
      %s124 = scalar_select %p121, %s122, %s123
      %p127 = pneg %p121
      %p128 = scmp.eq.s32.totalorder %s18, 1
      %p129 = por %p127, %p128
      %p130 = scmp.ne.s32.totalorder %s122, %s125
      %p131 = scmp.eq.s32.totalorder %s18, 0
      %p132 = por %p130, %p131
      %p133 = scmp.ne.s32.totalorder %s122, %s125
      %p134 = scmp.eq.s32.totalorder %s23, 1
      %p135 = por %p133, %p134
      %p136 = scmp.ne.s32.totalorder %s125, %s126
      %p137 = scmp.eq.s32.totalorder %s23, 0
      %p138 = por %p136, %p137
      %p139 = scmp.ne.s32.totalorder %s125, %s126
      %p140 = scmp.eq.s32.totalorder %s24, 1
      %p141 = por %p139, %p140
      %p143 = scmp.ne.s32.totalorder %s126, %s142
      %p144 = scmp.eq.s32.totalorder %s24, 0
      %p145 = por %p143, %p144
      %p146 = scmp.le.s32.totalorder 1, %s18
      %p147 = scmp.lt.s32.totalorder %s18, 3
      %p148 = pnand %p146, %p147
      %p149 = pneg %p148
      // Predicated region
      $region9: #{tpu_custom_call.1} parent=5 // pred_check
        _
      $region10: #{tpu_custom_call.1} parent=5 // pred_check_branch
        %151 = sbr.rel (%p148) target = $region12
      $region11: #{tpu_custom_call.1} parent=5 // pred_region
        %s152 = ssub.s32 %s18, 1
        // Predicated region
        $region13: #{tpu_custom_call.1} parent=11 // pred_check
          %p153 = pneg %p65
        $region14: #{tpu_custom_call.1} parent=11 // pred_check_branch
          %155 = sbr.rel (%p153) target = $region16
        $region15: #{tpu_custom_call.1} parent=11 // pred_region
          %s157 = ssub.s32 6912, 6912
          %158 = vsyncadd [#allocation3], %s157
          %s159 = sshll.u32 [#allocation2], 4
          %s160 = int_to_ptr.vmem [resolvable:$true] %s159
          %165 = dma.hbm_to_vmem [thread:$0]  %s1, 6912, %s160, [#allocation3], 256, 256, 16
        $region16: #{tpu_custom_call.1} parent=11 // pred_fallthru
          _
        // Predicated region
        $region17: #{tpu_custom_call.1} parent=11 // pred_check
          %p166 = pneg %p86
        $region18: #{tpu_custom_call.1} parent=11 // pred_check_branch
          %168 = sbr.rel (%p166) target = $region20
        $region19: #{tpu_custom_call.1} parent=11 // pred_region
          _
        $region20: #{tpu_custom_call.1} parent=11 // pred_fallthru
          _
      $region12: #{tpu_custom_call.1} parent=5 // pred_fallthru
        _
      %p169 = scmp.lt.s32.totalorder %s18, 2
      // Predicated region
      $region21: #{tpu_custom_call.1} parent=5 // pred_check
        %p170 = pneg %p169
      $region22: #{tpu_custom_call.1} parent=5 // pred_check_branch
        %172 = sbr.rel (%p170) target = $region24
      $region23: #{tpu_custom_call.1} parent=5 // pred_region
        // Predicated region
        $region25: #{tpu_custom_call.1} parent=23 // pred_check
          %p173 = pneg %p38
        $region26: #{tpu_custom_call.1} parent=23 // pred_check_branch
          %175 = sbr.rel (%p173) target = $region28
        $region27: #{tpu_custom_call.1} parent=23 // pred_region
          %p176 = scmp.lt.s32.totalorder %s18, 1
          %s177 = scalar_select %p176, %s18, 1
          %s178 = smul.addr %s177, 3
          %s179 = smul.addr %s178, 4
          %s180 = scalar_lea.vmem %s0, %s179
        $region28: #{tpu_custom_call.1} parent=23 // pred_fallthru
          _
      $region24: #{tpu_custom_call.1} parent=5 // pred_fallthru
        _
      %p181 = scmp.le.s32.totalorder 1, %s18
      %p182 = scmp.lt.s32.totalorder %s18, 3
      %p183 = pnand %p181, %p182
      %p184 = pneg %p183
      // Predicated region
      $region29: #{tpu_custom_call.1} parent=5 // pred_check
        _
      $region30: #{tpu_custom_call.1} parent=5 // pred_check_branch
        %186 = sbr.rel (%p183) target = $region32
      $region31: #{tpu_custom_call.1} parent=5 // pred_region
        %s187 = ssub.s32 %s18, 1
        // Predicated region
        $region33: #{tpu_custom_call.1} parent=31 // pred_check
          %p188 = pneg %p65
        $region34: #{tpu_custom_call.1} parent=31 // pred_check_branch
          %190 = sbr.rel (%p188) target = $region36
        $region35: #{tpu_custom_call.1} parent=31 // pred_region
          %191 = dma.done [#allocation3], 6912
        $region36: #{tpu_custom_call.1} parent=31 // pred_fallthru
          _
        %p192 = scmp.lt.s32.totalorder %s23, 1
        %s193 = scalar_select %p192, %s23, 1
        %s194 = smul.addr %s193, 3
        %s195 = smul.addr %s194, 4
        %s196 = scalar_lea.vmem %s0, %s195
        %p197 = pneg %p44
        %p198 = pneg %p41
        %p199 = pneg %p65
        %p200 = pneg %p62
        %p201 = pneg %p86
        %p202 = pneg %p83
        %p203 = pneg %p112
        %p204 = pneg %p109
        %s205 = sand.u32 %s99, 1
        %s206 = scalar_lea.sflag [#allocation4], %s205
        %s207 = sand.u32 %s99, 1
        %s208 = smul.addr %s207, 32
        %s209 = scalar_lea.vmem [#allocation5], %s208
        %p210 = pneg %p138
        %p211 = pneg %p135
        %s212 = sand.u32 %s125, 1
        %s213 = scalar_lea.sflag [#allocation7], %s212
        %s214 = sand.u32 %s125, 1
        %s215 = smul.addr %s214, 8
        %s216 = scalar_lea.vmem [#allocation6], %s215
        %p217 = scmp.lt.s32.totalorder %s23, 1
        %s218 = scalar_select %p217, %s23, 1
        %s219 = smul.addr %s218, 3
        %s220 = smul.addr %s219, 4
        %s221 = scalar_lea.vmem %s0, %s220
        %v223 = vld [vmem:[%s221] sm:$0xf]
        %v224 = vld [vmem:[%s221 + $0x4] sm:$0xf]
        %v225 = vld [vmem:[#allocation2] sm:$0xff]
        %v226 = vld [vmem:[#allocation2 + $0x8] sm:$0xff]
        %v227 = vld [vmem:[#allocation2 + $0x10] sm:$0xff]
        %v228 = vld [vmem:[#allocation2 + $0x18] sm:$0xff]
        %v229 = vld [vmem:[#allocation2 + $0x20] sm:$0xff]
        %v230 = vld [vmem:[#allocation2 + $0x28] sm:$0xff]
        %v231 = vld [vmem:[#allocation2 + $0x30] sm:$0xff]
        %v232 = vld [vmem:[#allocation2 + $0x38] sm:$0xff]
        %v233 = vld [vmem:[#allocation2 + $0x40] sm:$0xff]
        %v234 = vld [vmem:[#allocation2 + $0x48] sm:$0xff]
        %v235 = vld [vmem:[#allocation2 + $0x50] sm:$0xff]
        %v236 = vld [vmem:[#allocation2 + $0x58] sm:$0xff]
        %v237 = vld [vmem:[#allocation2 + $0x60] sm:$0xff]
        %v238 = vld [vmem:[#allocation2 + $0x68] sm:$0xff]
        %v239 = vld [vmem:[#allocation2 + $0x70] sm:$0xff]
        %v240 = vld [vmem:[#allocation2 + $0x78] sm:$0xff]
        %v241 = vld [vmem:[#allocation2 + $0x80] sm:$0xff]
        %v242 = vld [vmem:[#allocation2 + $0x88] sm:$0xff]
        %v243 = vld [vmem:[%s221 + $0x8] sm:$0x1]
        %s244 = scalar_lea.vmem [#allocation2], 144
        %v245 = vld [vmem:[%s244] sm:$0xff]
        %v246 = vld [vmem:[%s244 + $0x8] sm:$0xff]
        %v247 = vld [vmem:[%s244 + $0x10] sm:$0xff]
        %v248 = vld [vmem:[%s244 + $0x18] sm:$0xff]
        %v249 = vld [vmem:[%s244 + $0x20] sm:$0xff]
        %v250 = vld [vmem:[%s244 + $0x28] sm:$0xff]
        %v251 = vld [vmem:[%s244 + $0x30] sm:$0xff]
        %v252 = vld [vmem:[%s244 + $0x38] sm:$0xff]
        %v253 = vld [vmem:[%s244 + $0x40] sm:$0xff]
        %v254 = vld [vmem:[%s244 + $0x48] sm:$0xff]
        %v255 = vld [vmem:[%s244 + $0x50] sm:$0xff]
        %v256 = vld [vmem:[%s244 + $0x58] sm:$0xff]
        %v257 = vld [vmem:[%s244 + $0x60] sm:$0xff]
        %v258 = vld [vmem:[%s244 + $0x68] sm:$0xff]
        %v259 = vld [vmem:[%s244 + $0x70] sm:$0xff]
        %v260 = vld [vmem:[%s244 + $0x78] sm:$0xff]
        %v261 = vld [vmem:[%s244 + $0x80] sm:$0xff]
        %v262 = vld [vmem:[%s244 + $0x88] sm:$0xff]
        %v266 = vunpack.c.l.b16 %v223
        %v267 = vunpack.c.l.b16 %v224
        %v268 = vunpack.c.l.b16 %v243
        %v269 = vpack.c.b16 %v267, %v266
        %v270 = vpack.c.b16 %v268, %v268
        %vm271 = vsmask.f32 7424
        %v273 = vshrl.u32 %v269, 16
        %v275 = vshll.u32 %v269, 16
        %v277 = vrot.slane %v275, 1
        %v278 = vor.u32 %v273, %v277
        %v280 = vshll.u32 %v270, 16
        %v282 = vrot.slane %v280, 1
        %v283 = vsel %vm271, %v278, %v282
        %v302 = vunpack.c.l.b16 %v245
        %v303 = vunpack.c.h.b16 %v245
        %v304 = vunpack.c.l.b16 %v246
        %v305 = vunpack.c.h.b16 %v246
        %v306 = vunpack.c.l.b16 %v247
        %v307 = vunpack.c.h.b16 %v247
        %v308 = vunpack.c.l.b16 %v248
        %v309 = vunpack.c.h.b16 %v248
        %v310 = vunpack.c.l.b16 %v249
        %v311 = vunpack.c.h.b16 %v249
        %v312 = vunpack.c.l.b16 %v250
        %v313 = vunpack.c.h.b16 %v250
        %v314 = vunpack.c.l.b16 %v251
        %v315 = vunpack.c.h.b16 %v251
        %v316 = vunpack.c.l.b16 %v252
        %v317 = vunpack.c.h.b16 %v252
        %v318 = vunpack.c.l.b16 %v253
        %v319 = vunpack.c.h.b16 %v253
        %v320 = vunpack.c.l.b16 %v254
        %v321 = vunpack.c.h.b16 %v254
        %v322 = vunpack.c.l.b16 %v255
        %v323 = vunpack.c.h.b16 %v255
        %v324 = vunpack.c.l.b16 %v256
        %v325 = vunpack.c.h.b16 %v256
        %v326 = vunpack.c.l.b16 %v257
        %v327 = vunpack.c.h.b16 %v257
        %v328 = vunpack.c.l.b16 %v258
        %v329 = vunpack.c.h.b16 %v258
        %v330 = vunpack.c.l.b16 %v259
        %v331 = vunpack.c.h.b16 %v259
        %v332 = vunpack.c.l.b16 %v260
        %v333 = vunpack.c.h.b16 %v260
        %v334 = vunpack.c.l.b16 %v261
        %v335 = vunpack.c.h.b16 %v261
        %v336 = vunpack.c.l.b16 %v262
        %v337 = vunpack.c.h.b16 %v262
        %v338 = vpack.c.b16 %v306, %v302
        %v339 = vpack.c.b16 %v307, %v303
        %v340 = vpack.c.b16 %v308, %v304
        %v341 = vpack.c.b16 %v309, %v305
        %v342 = vpack.c.b16 %v314, %v310
        %v343 = vpack.c.b16 %v315, %v311
        %v344 = vpack.c.b16 %v316, %v312
        %v345 = vpack.c.b16 %v317, %v313
        %v346 = vpack.c.b16 %v322, %v318
        %v347 = vpack.c.b16 %v323, %v319
        %v348 = vpack.c.b16 %v324, %v320
        %v349 = vpack.c.b16 %v325, %v321
        %v350 = vpack.c.b16 %v330, %v326
        %v351 = vpack.c.b16 %v331, %v327
        %v352 = vpack.c.b16 %v332, %v328
        %v353 = vpack.c.b16 %v333, %v329
        %v354 = vpack.c.b16 %v334, %v334
        %v355 = vpack.c.b16 %v335, %v335
        %v356 = vpack.c.b16 %v336, %v336
        %v357 = vpack.c.b16 %v337, %v337
        %vm374 = vcmask 588800
        %v376 = vsel %vm374, %v283, 0
        %vm378 = vcmask 1043456
        %v380 = vsel %vm378, %v354, 0
        %v383 = vsel %vm378, %v355, 0
        %v386 = vsel %vm378, %v356, 0
        %v389 = vsel %vm378, %v357, 0
        %391 = vmatprep.subr.bf16.mxu0 0
        %392 = vmatpush1.bf16.msra.mxu0 0
        %393 = vmatprep.subr.bf16.mxu0 0
        %394 = vmatpush1.bf16.msra.mxu0 0
        %395 = vmatprep.subr.bf16.mxu0 0
        %396 = vmatpush1.bf16.msra.mxu0 0
        %397 = vmatprep.subr.bf16.mxu0 %v383
        %398 = vmatpush1.bf16.msra.mxu0 %v380
        %399 = vmatprep.subr.bf16.mxu0 %v351
        %400 = vmatpush1.bf16.msra.mxu0 %v350
        %401 = vmatprep.subr.bf16.mxu0 %v347
        %402 = vmatpush1.bf16.msra.mxu0 %v346
        %403 = vmatprep.subr.bf16.mxu0 %v343
        %404 = vmatpush1.bf16.msra.mxu0 %v342
        %405 = vmatprep.subr.bf16.mxu0 %v339
        %406 = vmatpush1.bf16.msra.mxu0 %v338
        %407 = vmatprep.subr.bf16.mxu0 0
        %408 = vmatpush2.bf16.msra.mxu0 0
        %409 = vmatprep.subr.bf16.mxu0 0
        %410 = vmatpush2.bf16.msra.mxu0 0
        %411 = vmatprep.subr.bf16.mxu0 0
        %412 = vmatpush2.bf16.msra.mxu0 0
        %413 = vmatprep.subr.bf16.mxu0 0
        %414 = vmatpush2.bf16.msra.mxu0 0
        %415 = vmatprep.subr.bf16.mxu0 0
        %416 = vmatpush2.bf16.msra.mxu0 0
        %417 = vmatprep.subr.bf16.mxu0 0
        %418 = vmatpush2.bf16.msra.mxu0 0
        %419 = vmatprep.subr.bf16.mxu0 0
        %420 = vmatpush2.bf16.msra.mxu0 0
        %421 = vmatprep.subr.bf16.mxu0 0
        %422 = vmatpush2.bf16.msra.mxu0 0
        %423 = vmatprep.mubr.bf16.mxu0 0
        %424 = vmatmul.mubr.bf16.gmra.mxu0 %v376
        %v425 = vpop.f32.mrf.mxu0
        %v426 = vadd.f32 0.0, %v425
        %v427 = vpop.f32.mrf.mxu0
        %v428 = vadd.f32 0.0, %v427
        %v429 = vpop.f32.mrf.mxu0
        %v430 = vadd.f32 0.0, %v429
        %v431 = vpop.f32.mrf.mxu0
        %v432 = vadd.f32 0.0, %v431
        %433 = vdwg.mxu0
        %434 = vmatprep.subr.bf16.mxu0 0
        %435 = vmatpush1.bf16.msra.mxu0 0
        %436 = vmatprep.subr.bf16.mxu0 0
        %437 = vmatpush1.bf16.msra.mxu0 0
        %438 = vmatprep.subr.bf16.mxu0 0
        %439 = vmatpush1.bf16.msra.mxu0 0
        %440 = vmatprep.subr.bf16.mxu0 %v389
        %441 = vmatpush1.bf16.msra.mxu0 %v386
        %442 = vmatprep.subr.bf16.mxu0 %v353
        %443 = vmatpush1.bf16.msra.mxu0 %v352
        %444 = vmatprep.subr.bf16.mxu0 %v349
        %445 = vmatpush1.bf16.msra.mxu0 %v348
        %446 = vmatprep.subr.bf16.mxu0 %v345
        %447 = vmatpush1.bf16.msra.mxu0 %v344
        %448 = vmatprep.subr.bf16.mxu0 %v341
        %449 = vmatpush1.bf16.msra.mxu0 %v340
        %450 = vmatprep.subr.bf16.mxu0 0
        %451 = vmatpush2.bf16.msra.mxu0 0
        %452 = vmatprep.subr.bf16.mxu0 0
        %453 = vmatpush2.bf16.msra.mxu0 0
        %454 = vmatprep.subr.bf16.mxu0 0
        %455 = vmatpush2.bf16.msra.mxu0 0
        %456 = vmatprep.subr.bf16.mxu0 0
        %457 = vmatpush2.bf16.msra.mxu0 0
        %458 = vmatprep.subr.bf16.mxu0 0
        %459 = vmatpush2.bf16.msra.mxu0 0
        %460 = vmatprep.subr.bf16.mxu0 0
        %461 = vmatpush2.bf16.msra.mxu0 0
        %462 = vmatprep.subr.bf16.mxu0 0
        %463 = vmatpush2.bf16.msra.mxu0 0
        %464 = vmatprep.subr.bf16.mxu0 0
        %465 = vmatpush2.bf16.msra.mxu0 0
        %466 = vmatprep.mubr.bf16.mxu0 0
        %467 = vmatmul.mubr.bf16.gmra.mxu0 %v376
        %v468 = vpop.f32.mrf.mxu0
        %v469 = vadd.f32 0.0, %v468
        %v470 = vpop.f32.mrf.mxu0
        %v471 = vadd.f32 0.0, %v470
        %v472 = vpop.f32.mrf.mxu0
        %v473 = vadd.f32 0.0, %v472
        %v474 = vpop.f32.mrf.mxu0
        %v475 = vadd.f32 0.0, %v474
        %476 = vdwg.mxu0
        %v495 = vunpack.c.l.b16 %v225
        %v496 = vunpack.c.h.b16 %v225
        %v497 = vunpack.c.l.b16 %v226
        %v498 = vunpack.c.h.b16 %v226
        %v499 = vunpack.c.l.b16 %v227
        %v500 = vunpack.c.h.b16 %v227
        %v501 = vunpack.c.l.b16 %v228
        %v502 = vunpack.c.h.b16 %v228
        %v503 = vunpack.c.l.b16 %v229
        %v504 = vunpack.c.h.b16 %v229
        %v505 = vunpack.c.l.b16 %v230
        %v506 = vunpack.c.h.b16 %v230
        %v507 = vunpack.c.l.b16 %v231
        %v508 = vunpack.c.h.b16 %v231
        %v509 = vunpack.c.l.b16 %v232
        %v510 = vunpack.c.h.b16 %v232
        %v511 = vunpack.c.l.b16 %v233
        %v512 = vunpack.c.h.b16 %v233
        %v513 = vunpack.c.l.b16 %v234
        %v514 = vunpack.c.h.b16 %v234
        %v515 = vunpack.c.l.b16 %v235
        %v516 = vunpack.c.h.b16 %v235
        %v517 = vunpack.c.l.b16 %v236
        %v518 = vunpack.c.h.b16 %v236
        %v519 = vunpack.c.l.b16 %v237
        %v520 = vunpack.c.h.b16 %v237
        %v521 = vunpack.c.l.b16 %v238
        %v522 = vunpack.c.h.b16 %v238
        %v523 = vunpack.c.l.b16 %v239
        %v524 = vunpack.c.h.b16 %v239
        %v525 = vunpack.c.l.b16 %v240
        %v526 = vunpack.c.h.b16 %v240
        %v527 = vunpack.c.l.b16 %v241
        %v528 = vunpack.c.h.b16 %v241
        %v529 = vunpack.c.l.b16 %v242
        %v530 = vunpack.c.h.b16 %v242
        %v531 = vpack.c.b16 %v499, %v495
        %v532 = vpack.c.b16 %v500, %v496
        %v533 = vpack.c.b16 %v501, %v497
        %v534 = vpack.c.b16 %v502, %v498
        %v535 = vpack.c.b16 %v507, %v503
        %v536 = vpack.c.b16 %v508, %v504
        %v537 = vpack.c.b16 %v509, %v505
        %v538 = vpack.c.b16 %v510, %v506
        %v539 = vpack.c.b16 %v515, %v511
        %v540 = vpack.c.b16 %v516, %v512
        %v541 = vpack.c.b16 %v517, %v513
        %v542 = vpack.c.b16 %v518, %v514
        %v543 = vpack.c.b16 %v523, %v519
        %v544 = vpack.c.b16 %v524, %v520
        %v545 = vpack.c.b16 %v525, %v521
        %v546 = vpack.c.b16 %v526, %v522
        %v547 = vpack.c.b16 %v527, %v527
        %v548 = vpack.c.b16 %v528, %v528
        %v549 = vpack.c.b16 %v529, %v529
        %v550 = vpack.c.b16 %v530, %v530
        %v567 = vsel %vm374, %v269, 0
        %v570 = vsel %vm378, %v547, 0
        %v573 = vsel %vm378, %v548, 0
        %v576 = vsel %vm378, %v549, 0
        %v579 = vsel %vm378, %v550, 0
        %581 = vmatprep.subr.bf16.mxu0 0
        %582 = vmatpush1.bf16.msra.mxu0 0
        %583 = vmatprep.subr.bf16.mxu0 0
        %584 = vmatpush1.bf16.msra.mxu0 0
        %585 = vmatprep.subr.bf16.mxu0 0
        %586 = vmatpush1.bf16.msra.mxu0 0
        %587 = vmatprep.subr.bf16.mxu0 %v573
        %588 = vmatpush1.bf16.msra.mxu0 %v570
        %589 = vmatprep.subr.bf16.mxu0 %v544
        %590 = vmatpush1.bf16.msra.mxu0 %v543
        %591 = vmatprep.subr.bf16.mxu0 %v540
        %592 = vmatpush1.bf16.msra.mxu0 %v539
        %593 = vmatprep.subr.bf16.mxu0 %v536
        %594 = vmatpush1.bf16.msra.mxu0 %v535
        %595 = vmatprep.subr.bf16.mxu0 %v532
        %596 = vmatpush1.bf16.msra.mxu0 %v531
        %597 = vmatprep.subr.bf16.mxu0 0
        %598 = vmatpush2.bf16.msra.mxu0 0
        %599 = vmatprep.subr.bf16.mxu0 0
        %600 = vmatpush2.bf16.msra.mxu0 0
        %601 = vmatprep.subr.bf16.mxu0 0
        %602 = vmatpush2.bf16.msra.mxu0 0
        %603 = vmatprep.subr.bf16.mxu0 0
        %604 = vmatpush2.bf16.msra.mxu0 0
        %605 = vmatprep.subr.bf16.mxu0 0
        %606 = vmatpush2.bf16.msra.mxu0 0
        %607 = vmatprep.subr.bf16.mxu0 0
        %608 = vmatpush2.bf16.msra.mxu0 0
        %609 = vmatprep.subr.bf16.mxu0 0
        %610 = vmatpush2.bf16.msra.mxu0 0
        %611 = vmatprep.subr.bf16.mxu0 0
        %612 = vmatpush2.bf16.msra.mxu0 0
        %613 = vmatprep.mubr.bf16.mxu0 0
        %614 = vmatmul.mubr.bf16.gmra.mxu0 %v567
        %v615 = vpop.f32.mrf.mxu0
        %v616 = vadd.f32 %v426, %v615
        %v617 = vpop.f32.mrf.mxu0
        %v618 = vadd.f32 %v428, %v617
        %v619 = vpop.f32.mrf.mxu0
        %v620 = vadd.f32 %v430, %v619
        %v621 = vpop.f32.mrf.mxu0
        %v622 = vadd.f32 %v432, %v621
        %623 = vdwg.mxu0
        %624 = vmatprep.subr.bf16.mxu0 0
        %625 = vmatpush1.bf16.msra.mxu0 0
        %626 = vmatprep.subr.bf16.mxu0 0
        %627 = vmatpush1.bf16.msra.mxu0 0
        %628 = vmatprep.subr.bf16.mxu0 0
        %629 = vmatpush1.bf16.msra.mxu0 0
        %630 = vmatprep.subr.bf16.mxu0 %v579
        %631 = vmatpush1.bf16.msra.mxu0 %v576
        %632 = vmatprep.subr.bf16.mxu0 %v546
        %633 = vmatpush1.bf16.msra.mxu0 %v545
        %634 = vmatprep.subr.bf16.mxu0 %v542
        %635 = vmatpush1.bf16.msra.mxu0 %v541
        %636 = vmatprep.subr.bf16.mxu0 %v538
        %637 = vmatpush1.bf16.msra.mxu0 %v537
        %638 = vmatprep.subr.bf16.mxu0 %v534
        %639 = vmatpush1.bf16.msra.mxu0 %v533
        %640 = vmatprep.subr.bf16.mxu0 0
        %641 = vmatpush2.bf16.msra.mxu0 0
        %642 = vmatprep.subr.bf16.mxu0 0
        %643 = vmatpush2.bf16.msra.mxu0 0
        %644 = vmatprep.subr.bf16.mxu0 0
        %645 = vmatpush2.bf16.msra.mxu0 0
        %646 = vmatprep.subr.bf16.mxu0 0
        %647 = vmatpush2.bf16.msra.mxu0 0
        %648 = vmatprep.subr.bf16.mxu0 0
        %649 = vmatpush2.bf16.msra.mxu0 0
        %650 = vmatprep.subr.bf16.mxu0 0
        %651 = vmatpush2.bf16.msra.mxu0 0
        %652 = vmatprep.subr.bf16.mxu0 0
        %653 = vmatpush2.bf16.msra.mxu0 0
        %654 = vmatprep.subr.bf16.mxu0 0
        %655 = vmatpush2.bf16.msra.mxu0 0
        %656 = vmatprep.mubr.bf16.mxu0 0
        %657 = vmatmul.mubr.bf16.gmra.mxu0 %v567
        %v658 = vpop.f32.mrf.mxu0
        %v659 = vadd.f32 %v469, %v658
        %v660 = vpop.f32.mrf.mxu0
        %v661 = vadd.f32 %v471, %v660
        %v662 = vpop.f32.mrf.mxu0
        %v663 = vadd.f32 %v473, %v662
        %v664 = vpop.f32.mrf.mxu0
        %v665 = vadd.f32 %v475, %v664
        %666 = vdwg.mxu0
        %v667 = vld [vmem:[%s221] sm:$0xe]
        %s668 = scalar_lea.vmem [#allocation2], 288
        %v669 = vld [vmem:[%s668] sm:$0xff]
        %v670 = vld [vmem:[%s668 + $0x8] sm:$0xff]
        %v671 = vld [vmem:[%s668 + $0x10] sm:$0xff]
        %v672 = vld [vmem:[%s668 + $0x18] sm:$0xff]
        %v673 = vld [vmem:[%s668 + $0x20] sm:$0xff]
        %v674 = vld [vmem:[%s668 + $0x28] sm:$0xff]
        %v675 = vld [vmem:[%s668 + $0x30] sm:$0xff]
        %v676 = vld [vmem:[%s668 + $0x38] sm:$0xff]
        %v677 = vld [vmem:[%s668 + $0x40] sm:$0xff]
        %v678 = vld [vmem:[%s668 + $0x48] sm:$0xff]
        %v679 = vld [vmem:[%s668 + $0x50] sm:$0xff]
        %v680 = vld [vmem:[%s668 + $0x58] sm:$0xff]
        %v681 = vld [vmem:[%s668 + $0x60] sm:$0xff]
        %v682 = vld [vmem:[%s668 + $0x68] sm:$0xff]
        %v683 = vld [vmem:[%s668 + $0x70] sm:$0xff]
        %v684 = vld [vmem:[%s668 + $0x78] sm:$0xff]
        %v685 = vld [vmem:[%s668 + $0x80] sm:$0xff]
        %v686 = vld [vmem:[%s668 + $0x88] sm:$0xff]
        %v688 = vunpack.c.l.b16 %v667
        %v689 = vpack.c.b16 %v267, %v688
        %vm690 = vcmask 1046528
        %v691 = vrot.slane %v689, 1
        %v692 = vrot.slane %v270, 1
        %v693 = vsel %vm690, %v691, %v692
        %v712 = vunpack.c.l.b16 %v669
        %v713 = vunpack.c.h.b16 %v669
        %v714 = vunpack.c.l.b16 %v670
        %v715 = vunpack.c.h.b16 %v670
        %v716 = vunpack.c.l.b16 %v671
        %v717 = vunpack.c.h.b16 %v671
        %v718 = vunpack.c.l.b16 %v672
        %v719 = vunpack.c.h.b16 %v672
        %v720 = vunpack.c.l.b16 %v673
        %v721 = vunpack.c.h.b16 %v673
        %v722 = vunpack.c.l.b16 %v674
        %v723 = vunpack.c.h.b16 %v674
        %v724 = vunpack.c.l.b16 %v675
        %v725 = vunpack.c.h.b16 %v675
        %v726 = vunpack.c.l.b16 %v676
        %v727 = vunpack.c.h.b16 %v676
        %v728 = vunpack.c.l.b16 %v677
        %v729 = vunpack.c.h.b16 %v677
        %v730 = vunpack.c.l.b16 %v678
        %v731 = vunpack.c.h.b16 %v678
        %v732 = vunpack.c.l.b16 %v679
        %v733 = vunpack.c.h.b16 %v679
        %v734 = vunpack.c.l.b16 %v680
        %v735 = vunpack.c.h.b16 %v680
        %v736 = vunpack.c.l.b16 %v681
        %v737 = vunpack.c.h.b16 %v681
        %v738 = vunpack.c.l.b16 %v682
        %v739 = vunpack.c.h.b16 %v682
        %v740 = vunpack.c.l.b16 %v683
        %v741 = vunpack.c.h.b16 %v683
        %v742 = vunpack.c.l.b16 %v684
        %v743 = vunpack.c.h.b16 %v684
        %v744 = vunpack.c.l.b16 %v685
        %v745 = vunpack.c.h.b16 %v685
        %v746 = vunpack.c.l.b16 %v686
        %v747 = vunpack.c.h.b16 %v686
        %v748 = vpack.c.b16 %v716, %v712
        %v749 = vpack.c.b16 %v717, %v713
        %v750 = vpack.c.b16 %v718, %v714
        %v751 = vpack.c.b16 %v719, %v715
        %v752 = vpack.c.b16 %v724, %v720
        %v753 = vpack.c.b16 %v725, %v721
        %v754 = vpack.c.b16 %v726, %v722
        %v755 = vpack.c.b16 %v727, %v723
        %v756 = vpack.c.b16 %v732, %v728
        %v757 = vpack.c.b16 %v733, %v729
        %v758 = vpack.c.b16 %v734, %v730
        %v759 = vpack.c.b16 %v735, %v731
        %v760 = vpack.c.b16 %v740, %v736
        %v761 = vpack.c.b16 %v741, %v737
        %v762 = vpack.c.b16 %v742, %v738
        %v763 = vpack.c.b16 %v743, %v739
        %v764 = vpack.c.b16 %v744, %v744
        %v765 = vpack.c.b16 %v745, %v745
        %v766 = vpack.c.b16 %v746, %v746
        %v767 = vpack.c.b16 %v747, %v747
        %v785 = vsel %vm374, %v693, 0
        %v788 = vsel %vm378, %v764, 0
        %v791 = vsel %vm378, %v765, 0
        %v794 = vsel %vm378, %v766, 0
        %v797 = vsel %vm378, %v767, 0
        %799 = vmatprep.subr.bf16.mxu0 0
        %800 = vmatpush1.bf16.msra.mxu0 0
        %801 = vmatprep.subr.bf16.mxu0 0
        %802 = vmatpush1.bf16.msra.mxu0 0
        %803 = vmatprep.subr.bf16.mxu0 0
        %804 = vmatpush1.bf16.msra.mxu0 0
        %805 = vmatprep.subr.bf16.mxu0 %v791
        %806 = vmatpush1.bf16.msra.mxu0 %v788
        %807 = vmatprep.subr.bf16.mxu0 %v761
        %808 = vmatpush1.bf16.msra.mxu0 %v760
        %809 = vmatprep.subr.bf16.mxu0 %v757
        %810 = vmatpush1.bf16.msra.mxu0 %v756
        %811 = vmatprep.subr.bf16.mxu0 %v753
        %812 = vmatpush1.bf16.msra.mxu0 %v752
        %813 = vmatprep.subr.bf16.mxu0 %v749
        %814 = vmatpush1.bf16.msra.mxu0 %v748
        %815 = vmatprep.subr.bf16.mxu0 0
        %816 = vmatpush2.bf16.msra.mxu0 0
        %817 = vmatprep.subr.bf16.mxu0 0
        %818 = vmatpush2.bf16.msra.mxu0 0
        %819 = vmatprep.subr.bf16.mxu0 0
        %820 = vmatpush2.bf16.msra.mxu0 0
        %821 = vmatprep.subr.bf16.mxu0 0
        %822 = vmatpush2.bf16.msra.mxu0 0
        %823 = vmatprep.subr.bf16.mxu0 0
        %824 = vmatpush2.bf16.msra.mxu0 0
        %825 = vmatprep.subr.bf16.mxu0 0
        %826 = vmatpush2.bf16.msra.mxu0 0
        %827 = vmatprep.subr.bf16.mxu0 0
        %828 = vmatpush2.bf16.msra.mxu0 0
        %829 = vmatprep.subr.bf16.mxu0 0
        %830 = vmatpush2.bf16.msra.mxu0 0
        %831 = vmatprep.mubr.bf16.mxu0 0
        %832 = vmatmul.mubr.bf16.gmra.mxu0 %v785
        %v833 = vpop.f32.mrf.mxu0
        %v834 = vadd.f32 0.0, %v833
        %v835 = vpop.f32.mrf.mxu0
        %v836 = vadd.f32 0.0, %v835
        %v837 = vpop.f32.mrf.mxu0
        %v838 = vadd.f32 0.0, %v837
        %v839 = vpop.f32.mrf.mxu0
        %v840 = vadd.f32 0.0, %v839
        %841 = vdwg.mxu0
        %842 = vmatprep.subr.bf16.mxu0 0
        %843 = vmatpush1.bf16.msra.mxu0 0
        %844 = vmatprep.subr.bf16.mxu0 0
        %845 = vmatpush1.bf16.msra.mxu0 0
        %846 = vmatprep.subr.bf16.mxu0 0
        %847 = vmatpush1.bf16.msra.mxu0 0
        %848 = vmatprep.subr.bf16.mxu0 %v797
        %849 = vmatpush1.bf16.msra.mxu0 %v794
        %850 = vmatprep.subr.bf16.mxu0 %v763
        %851 = vmatpush1.bf16.msra.mxu0 %v762
        %852 = vmatprep.subr.bf16.mxu0 %v759
        %853 = vmatpush1.bf16.msra.mxu0 %v758
        %854 = vmatprep.subr.bf16.mxu0 %v755
        %855 = vmatpush1.bf16.msra.mxu0 %v754
        %856 = vmatprep.subr.bf16.mxu0 %v751
        %857 = vmatpush1.bf16.msra.mxu0 %v750
        %858 = vmatprep.subr.bf16.mxu0 0
        %859 = vmatpush2.bf16.msra.mxu0 0
        %860 = vmatprep.subr.bf16.mxu0 0
        %861 = vmatpush2.bf16.msra.mxu0 0
        %862 = vmatprep.subr.bf16.mxu0 0
        %863 = vmatpush2.bf16.msra.mxu0 0
        %864 = vmatprep.subr.bf16.mxu0 0
        %865 = vmatpush2.bf16.msra.mxu0 0
        %866 = vmatprep.subr.bf16.mxu0 0
        %867 = vmatpush2.bf16.msra.mxu0 0
        %868 = vmatprep.subr.bf16.mxu0 0
        %869 = vmatpush2.bf16.msra.mxu0 0
        %870 = vmatprep.subr.bf16.mxu0 0
        %871 = vmatpush2.bf16.msra.mxu0 0
        %872 = vmatprep.subr.bf16.mxu0 0
        %873 = vmatpush2.bf16.msra.mxu0 0
        %874 = vmatprep.mubr.bf16.mxu0 0
        %875 = vmatmul.mubr.bf16.gmra.mxu0 %v785
        %v876 = vpop.f32.mrf.mxu0
        %v877 = vadd.f32 0.0, %v876
        %v878 = vpop.f32.mrf.mxu0
        %v879 = vadd.f32 0.0, %v878
        %v880 = vpop.f32.mrf.mxu0
        %v881 = vadd.f32 0.0, %v880
        %v882 = vpop.f32.mrf.mxu0
        %v883 = vadd.f32 0.0, %v882
        %884 = vdwg.mxu0
        %v885 = vadd.f32 %v616, %v834
        %v886 = vadd.f32 %v618, %v836
        %v887 = vadd.f32 %v659, %v877
        %v888 = vadd.f32 %v661, %v879
        %v889 = vadd.f32 %v620, %v838
        %v890 = vadd.f32 %v622, %v840
        %v891 = vadd.f32 %v663, %v881
        %v892 = vadd.f32 %v665, %v883
        %v893 = vld [vmem:[%s2] sm:$0xf]
        %v895 = vlaneseq
        %v896 = vshrl.u32 %v895, 7
        %v897 = vsub.s32 0, %v896
        %v898 = vrot.slane %v893, %v897
        %v899 = vlaneseq
        %v900 = vshrl.u32 %v899, 7
        %v901 = vsub.s32 1, %v900
        %v902 = vrot.slane %v893, %v901
        %v903 = vlaneseq
        %v904 = vshrl.u32 %v903, 7
        %v905 = vsub.s32 2, %v904
        %v906 = vrot.slane %v893, %v905
        %v907 = vlaneseq
        %v908 = vshrl.u32 %v907, 7
        %v909 = vsub.s32 3, %v908
        %v910 = vrot.slane %v893, %v909
        %v915 = vadd.f32 %v885, %v898
        %v916 = vadd.f32 %v886, %v902
        %v917 = vadd.f32 %v887, %v906
        %v918 = vadd.f32 %v888, %v910
        %v919 = vadd.f32 %v889, %v898
        %v920 = vadd.f32 %v890, %v902
        %v921 = vadd.f32 %v891, %v906
        %v922 = vadd.f32 %v892, %v910
        %v923 = vpack.c.bf16 %v919, %v915
        %v924 = vpack.c.bf16 %v920, %v916
        %v925 = vpack.c.bf16 %v921, %v917
        %v926 = vpack.c.bf16 %v922, %v918
        %v931 = vunpack.c.l.b16 %v923
        %v932 = vunpack.c.l.b16 %v924
        %v933 = vunpack.c.l.b16 %v925
        %v934 = vunpack.c.l.b16 %v926
        %v935 = vunpack.c.h.b16 %v923
        %v936 = vunpack.c.h.b16 %v924
        %v937 = vunpack.c.h.b16 %v925
        %v938 = vunpack.c.h.b16 %v926
        %v939 = vpack.c.b16 %v932, %v931
        %v940 = vpack.c.b16 %v934, %v933
        %v941 = vpack.c.b16 %v936, %v935
        %v942 = vpack.c.b16 %v938, %v937
        %947 = vst [vmem:[%s209] sm:$0xff] %v939
        %948 = vst [vmem:[%s209 + $0x8] sm:$0xff] %v940
        %949 = vst [vmem:[%s209 + $0x10] sm:$0xff] %v941
        %950 = vst [vmem:[%s209 + $0x18] sm:$0xff] %v942
        %v951 = vadd.f32 %v885, %v889
        %v952 = vrot.slane %v951, 4
        %v953 = vadd.f32 %v951, %v952
        %v954 = vrot.slane %v953, 2
        %v955 = vadd.f32 %v953, %v954
        %v956 = vrot.slane %v955, 1
        %v957 = vadd.f32 %v955, %v956
        %v958 = vadd.f32 %v886, %v890
        %v959 = vrot.slane %v958, 4
        %v960 = vadd.f32 %v958, %v959
        %v961 = vrot.slane %v960, 2
        %v962 = vadd.f32 %v960, %v961
        %v963 = vrot.slane %v962, 1
        %v964 = vadd.f32 %v962, %v963
        %v965 = vadd.f32 %v887, %v891
        %v966 = vrot.slane %v965, 4
        %v967 = vadd.f32 %v965, %v966
        %v968 = vrot.slane %v967, 2
        %v969 = vadd.f32 %v967, %v968
        %v970 = vrot.slane %v969, 1
        %v971 = vadd.f32 %v969, %v970
        %v972 = vadd.f32 %v888, %v892
        %v973 = vrot.slane %v972, 4
        %v974 = vadd.f32 %v972, %v973
        %v975 = vrot.slane %v974, 2
        %v976 = vadd.f32 %v974, %v975
        %v977 = vrot.slane %v976, 1
        %v978 = vadd.f32 %v976, %v977
        %v983 = vcombine.low %v957, %v964
        %v984 = vcombine.low %v971, %v978
        %v986 = vunpack.c.l.s4 1966171168
        %v987 = vunpack.c.0.s8 %v986
        %v988 = vlaneseq
        %v989 = vshrl.u32 %v988, 7
        %v990 = vsub.s32 %v987, %v989
        %v991 = vrot.slane %v983, %v990
        %v993 = vunpack.c.l.s4 1966171168
        %v994 = vunpack.c.0.s8 %v993
        %v995 = vlaneseq
        %v996 = vshrl.u32 %v995, 7
        %v997 = vsub.s32 %v994, %v996
        %v998 = vrot.slane %v984, %v997
        %v999 = vcombine.low %v991, %v998
        %v1001 = vunpack.c.l.s4 1966171168
        %v1002 = vunpack.c.0.s8 %v1001
        %v1003 = vlaneseq
        %v1004 = vshrl.u32 %v1003, 7
        %v1005 = vsub.s32 %v1002, %v1004
        %v1006 = vrot.slane %v999, %v1005
        %v1008 = vlaneseq
        %vm1009 = vcmp.ge.s32.totalorder %v1008, 0
        %vm1010 = vcmp.lt.s32.totalorder %v1008, 512
        %vm1011 = vmand %vm1009, %vm1010
        %1012 = vst.msk [vmem:[%s216] ss:$2 sm:$0xf] %vm1011, %v1006
        %v1013 = vmul.f32 %v885, %v885
        %v1014 = vmul.f32 %v886, %v886
        %v1015 = vmul.f32 %v887, %v887
        %v1016 = vmul.f32 %v888, %v888
        %v1017 = vmul.f32 %v889, %v889
        %v1018 = vmul.f32 %v890, %v890
        %v1019 = vmul.f32 %v891, %v891
        %v1020 = vmul.f32 %v892, %v892
        %v1021 = vadd.f32 %v1013, %v1017
        %v1022 = vrot.slane %v1021, 4
        %v1023 = vadd.f32 %v1021, %v1022
        %v1024 = vrot.slane %v1023, 2
        %v1025 = vadd.f32 %v1023, %v1024
        %v1026 = vrot.slane %v1025, 1
        %v1027 = vadd.f32 %v1025, %v1026
        %v1028 = vadd.f32 %v1014, %v1018
        %v1029 = vrot.slane %v1028, 4
        %v1030 = vadd.f32 %v1028, %v1029
        %v1031 = vrot.slane %v1030, 2
        %v1032 = vadd.f32 %v1030, %v1031
        %v1033 = vrot.slane %v1032, 1
        %v1034 = vadd.f32 %v1032, %v1033
        %v1035 = vadd.f32 %v1015, %v1019
        %v1036 = vrot.slane %v1035, 4
        %v1037 = vadd.f32 %v1035, %v1036
        %v1038 = vrot.slane %v1037, 2
        %v1039 = vadd.f32 %v1037, %v1038
        %v1040 = vrot.slane %v1039, 1
        %v1041 = vadd.f32 %v1039, %v1040
        %v1042 = vadd.f32 %v1016, %v1020
        %v1043 = vrot.slane %v1042, 4
        %v1044 = vadd.f32 %v1042, %v1043
        %v1045 = vrot.slane %v1044, 2
        %v1046 = vadd.f32 %v1044, %v1045
        %v1047 = vrot.slane %v1046, 1
        %v1048 = vadd.f32 %v1046, %v1047
        %v1053 = vcombine.low %v1027, %v1034
        %v1054 = vcombine.low %v1041, %v1048
        %v1056 = vunpack.c.l.s4 1966171168
        %v1057 = vunpack.c.0.s8 %v1056
        %v1058 = vlaneseq
        %v1059 = vshrl.u32 %v1058, 7
        %v1060 = vsub.s32 %v1057, %v1059
        %v1061 = vrot.slane %v1053, %v1060
        %v1063 = vunpack.c.l.s4 1966171168
        %v1064 = vunpack.c.0.s8 %v1063
        %v1065 = vlaneseq
        %v1066 = vshrl.u32 %v1065, 7
        %v1067 = vsub.s32 %v1064, %v1066
        %v1068 = vrot.slane %v1054, %v1067
        %v1069 = vcombine.low %v1061, %v1068
        %v1071 = vunpack.c.l.s4 1966171168
        %v1072 = vunpack.c.0.s8 %v1071
        %v1073 = vlaneseq
        %v1074 = vshrl.u32 %v1073, 7
        %v1075 = vsub.s32 %v1072, %v1074
        %v1076 = vrot.slane %v1069, %v1075
        %s1078 = scalar_lea.vmem %s216, 1 [#allocation6]
        %1079 = vst.msk [vmem:[%s1078] ss:$2 sm:$0xf] %vm1011, %v1076
        %s1080 = sand.u32 %s99, 1
        %s1081 = scalar_lea.sflag [#allocation4], %s1080
        %s1082 = sand.u32 %s99, 1
        %s1083 = smul.addr %s1082, 32
        %s1084 = scalar_lea.vmem [#allocation5], %s1083
        %s1085 = sand.u32 %s125, 1
        %s1086 = scalar_lea.sflag [#allocation7], %s1085
        %s1087 = sand.u32 %s125, 1
        %s1088 = smul.addr %s1087, 8
        %s1089 = scalar_lea.vmem [#allocation6], %s1088
        // Predicated region
        $region37: #{tpu_custom_call.1} parent=31 // pred_check
          %p1090 = pneg %p109
        $region38: #{tpu_custom_call.1} parent=31 // pred_check_branch
          %1092 = sbr.rel (%p1090) target = $region40
        $region39: #{tpu_custom_call.1} parent=31 // pred_region
          %s1094 = ssub.s32 512, 512
          %1095 = vsyncadd %s1081, %s1094
          %s1096 = smul.addr %s23, 8
          %s1097 = smul.addr %s1096, 64
          %s1098 = scalar_lea.hbm %s3, %s1097
          %s1099 = sshll.u32 %s1084, 4
          %s1100 = int_to_ptr.vmem [resolvable:$true] %s1099
          %1105 = dma.vmem_to_hbm [thread:$0]  %s1100, 512, %s1098, %s1081, 256, 256, 16
        $region40: #{tpu_custom_call.1} parent=31 // pred_fallthru
          _
        // Predicated region
        $region41: #{tpu_custom_call.1} parent=31 // pred_check
          %p1106 = pneg %p135
        $region42: #{tpu_custom_call.1} parent=31 // pred_check_branch
          %1108 = sbr.rel (%p1106) target = $region44
        $region43: #{tpu_custom_call.1} parent=31 // pred_region
          %s1110 = ssub.s32 128, 128
          %1111 = vsyncadd %s1086, %s1110
          %s1112 = smul.addr %s23, 4
          %s1113 = smul.addr %s1112, 32
          %s1114 = scalar_lea.hbm %s4, %s1113
          %s1116 = sshll.u32 %s1089, 4
          %s1117 = int_to_ptr.vmem [resolvable:$true] %s1116
          %1119 = dma.vmem_to_hbm [thread:$0]  %s1117, 128, %s1114, %s1086
        $region44: #{tpu_custom_call.1} parent=31 // pred_fallthru
          _
      $region32: #{tpu_custom_call.1} parent=5 // pred_fallthru
        _
      %p1120 = scmp.le.s32.totalorder 2, %s18
      // Predicated region
      $region45: #{tpu_custom_call.1} parent=5 // pred_check
        %p1121 = pneg %p1120
      $region46: #{tpu_custom_call.1} parent=5 // pred_check_branch
        %1123 = sbr.rel (%p1121) target = $region48
      $region47: #{tpu_custom_call.1} parent=5 // pred_region
        %s1124 = ssub.s32 %s18, 2
        // Predicated region
        $region49: #{tpu_custom_call.1} parent=47 // pred_check
          %p1125 = pneg %p115
        $region50: #{tpu_custom_call.1} parent=47 // pred_check_branch
          %1127 = sbr.rel (%p1125) target = $region52
        $region51: #{tpu_custom_call.1} parent=47 // pred_region
          %s1128 = sand.u32 %s100, 1
          %s1129 = scalar_lea.sflag [#allocation4], %s1128
          %s1130 = sand.u32 %s100, 1
          %s1131 = smul.addr %s1130, 32
          %s1132 = scalar_lea.vmem [#allocation5], %s1131
          %1133 = dma.done %s1129, 512
        $region52: #{tpu_custom_call.1} parent=47 // pred_fallthru
          _
        // Predicated region
        $region53: #{tpu_custom_call.1} parent=47 // pred_check
          %p1134 = pneg %p141
        $region54: #{tpu_custom_call.1} parent=47 // pred_check_branch
          %1136 = sbr.rel (%p1134) target = $region56
        $region55: #{tpu_custom_call.1} parent=47 // pred_region
          %s1137 = sand.u32 %s126, 1
          %s1138 = scalar_lea.sflag [#allocation7], %s1137
          %s1139 = sand.u32 %s126, 1
          %s1140 = smul.addr %s1139, 8
          %s1141 = scalar_lea.vmem [#allocation6], %s1140
          %1142 = dma.done %s1138, 128
        $region56: #{tpu_custom_call.1} parent=47 // pred_fallthru
          _
      $region48: #{tpu_custom_call.1} parent=5 // pred_fallthru
        _
    $region6: #{tpu_custom_call.1} parent=1 // loop_footer
      %s22 = sadd.s32 1, %s18
    $region7: #{tpu_custom_call.1} parent=1 // loop_footer_branch
      %17 = sbr.rel target = $region3
    $region8: #{tpu_custom_call.1} parent=1 // loop_exit
      _
    %1143 = vsyncpa [#allocation3], 1
    %s1144 = scalar_lea.sflag [#allocation3], 1
    %1145 = vsyncpa %s1144, 1
    %1146 = vsyncpa [#allocation4], 1
    %s1147 = scalar_lea.sflag [#allocation4], 1
    %1148 = vsyncpa %s1147, 1
    %1149 = vsyncpa [#allocation7], 1
    %s1150 = scalar_lea.sflag [#allocation7], 1
    %1151 = vsyncpa %s1150, 1

</llo_original>
